<compile_context>
chip_gen: v7x
topology: tpu7x:2x2x1
jax: 0.10.0
libtpu: 0.0.40
codegen_flags: <defaults>
</compile_context>

<pallas_src>
import jax
import jax.numpy as jnp
from jax.experimental import pallas as pl
from jax.experimental.pallas import tpu as pltpu

DIM = 64        # self.dim
KPAD = 32       # fused contraction depth: cols 0..15 conv branch, 16..31 lin branch
CPAD = 128      # lane-dense output width of every fused weight tile
EPS = 1e-20     # self.eps
LIN = 16        # first column / row of the linear-branch block


def quadratics_kernel(state_ref, scal_ref, w_ref, out_ref):
    st = state_ref[...]                 # (DIM, 8) f32
    x0 = st[:, 0:1]                     # current_state[0]
    x1 = st[:, 1:2]                     # current_state[1] (== current_state[-1])
    g = st[:, 2:3]                      # gradient at current_state[1]

    loss = scal_ref[0]                  # SMEM scalars
    old_loss = scal_ref[1]

    # ---- merged norm reduction: one sublane reduce yields both ||g||^2, ||m||^2 ----
    m = x1 - x0                         # momentum
    col8 = jax.lax.broadcasted_iota(jnp.int32, (DIM, 8), 1)
    gm = jnp.where(col8 == 0, g, 0.0) + jnp.where(col8 == 1, m, 0.0)
    ss = jnp.sum(gm * gm, axis=0, keepdims=True)            # (1, 8)
    gsq = ss[0, 0]
    msq = ss[0, 1]
    gnorm = jnp.sqrt(gsq)
    mnorm = jnp.sqrt(msq)
    gn = jnp.where(gnorm > EPS, g * jax.lax.rsqrt(gsq), g)  # rsqrt -> EUP slot
    mn = jnp.where(mnorm > EPS, m * jax.lax.rsqrt(msq), m)

    # ---- fused LHS (DIM, 32), built at its real contraction width ----
    # direction-net features per position i in cols 0..2: [g_i, m_i, g_i*m_i]
    # step-size MLP features in row 0, cols 16..19:
    #   [log(1+|g|), log(1+|m|), log(1+loss), log(1+old_loss)]
    row = jax.lax.broadcasted_iota(jnp.int32, (DIM, KPAD), 0)
    col = jax.lax.broadcasted_iota(jnp.int32, (DIM, KPAD), 1)
    dir_part = (jnp.where(col == 0, gn, 0.0)
                + jnp.where(col == 1, mn, 0.0)
                + jnp.where(col == 2, gn * mn, 0.0))
    mlp_raw = jnp.where(
        row == 0,
        jnp.where(col == LIN + 0, gnorm,
        jnp.where(col == LIN + 1, mnorm,
        jnp.where(col == LIN + 2, loss,
        jnp.where(col == LIN + 3, old_loss, 0.0)))),
        0.0)
    x = (dir_part + jnp.log(1.0 + mlp_raw)).astype(jnp.bfloat16)

    # ---- 5 block-diagonal fused layers (bias=False everywhere) ----
    # conv blocks : [C0@C1], ReLU, [C2], ReLU, [C3], ReLU, [C4], ReLU, [C5@C6]
    # lin  blocks : [L0@L1], ReLU, [L2], ReLU, [ I ], ReLU, [L3], ReLU, [L4@L5]
    # (the identity + extra ReLU at slot 2 is exact: ReLU is idempotent)
    z = jnp.dot(x, w_ref[0], preferred_element_type=jnp.float32)
    z = jnp.maximum(z[:, :KPAD], 0.0).astype(jnp.bfloat16)
    z = jnp.dot(z, w_ref[1], preferred_element_type=jnp.float32)
    z = jnp.maximum(z[:, :KPAD], 0.0).astype(jnp.bfloat16)
    z = jnp.dot(z, w_ref[2], preferred_element_type=jnp.float32)
    z = jnp.maximum(z[:, :KPAD], 0.0).astype(jnp.bfloat16)
    z = jnp.dot(z, w_ref[3], preferred_element_type=jnp.float32)
    z = jnp.maximum(z[:, :KPAD], 0.0).astype(jnp.bfloat16)
    z = jnp.dot(z, w_ref[4], preferred_element_type=jnp.float32)

    direction = z[:, 0:1]               # conv output channel 0
    step_size = z[0, LIN]               # lin output channel 0, row 0

    # ---- final update: current_state[-1] - step_size * direction ----
    out_ref[...] = x1 - step_size * direction


@jax.jit
def quadratics_forward(x0, x1, g, loss, old_loss, w):
    """x0, x1, g: (dim,) f32; loss/old_loss: scalars; w: (5,32,128) bf16 fused
    block-diagonal weights.  Returns the new iterate, shape (dim,)."""
    state = jnp.zeros((DIM, 8), jnp.float32)
    state = state.at[:, 0].set(x0.astype(jnp.float32))
    state = state.at[:, 1].set(x1.astype(jnp.float32))
    state = state.at[:, 2].set(g.astype(jnp.float32))
    scal = jnp.stack([loss, old_loss]).astype(jnp.float32)        # (2,) -> SMEM

    vmem = lambda: pl.BlockSpec(memory_space=pltpu.MemorySpace.VMEM)
    smem = pl.BlockSpec(memory_space=pltpu.MemorySpace.SMEM)
    out = pl.pallas_call(
        quadratics_kernel,
        out_shape=jax.ShapeDtypeStruct((DIM, 1), jnp.float32),
        in_specs=[vmem(), smem, vmem()],
        out_specs=vmem(),
        cost_estimate=pl.CostEstimate(
            flops=5 * 2 * DIM * KPAD * CPAD,
            transcendentals=DIM * KPAD + 8,
            bytes_accessed=DIM * 8 * 4 + 8 + 5 * KPAD * CPAD * 2 + DIM * 4),
    )(state, scal, w)
    return out.reshape(-1)


def init_module_weights(key):
    """Per-layer bias-free weights in (in, out) layout (== torch weight.T),
    uniform in [-1/sqrt(fan_in), 1/sqrt(fan_in)] like the torch default."""
    conv_dims = [(3, 10), (10, 10), (10, 10), (10, 10), (10, 10), (10, 10), (10, 1)]
    lin_dims = [(4, 8), (8, 8), (8, 8), (8, 8), (8, 8), (8, 1)]
    keys = jax.random.split(key, len(conv_dims) + len(lin_dims))

    def init(k, cin, cout):
        bound = 1.0 / jnp.sqrt(jnp.float32(cin))
        return jax.random.uniform(k, (cin, cout), jnp.float32, -bound, bound)

    conv_w = [init(k, ci, co) for k, (ci, co) in zip(keys[:7], conv_dims)]
    lin_w = [init(k, ci, co) for k, (ci, co) in zip(keys[7:], lin_dims)]
    return conv_w, lin_w


def pack_params(conv_w, lin_w):
    """Host-side preprocessing:
      * fuse the no-ReLU adjacent pairs (C0@C1, C5@C6, L0@L1, L4@L5),
      * pad the 4-layer linear branch to 5 layers with an identity block at an
        interior ReLU slot (exact: ReLU idempotent, no biases),
      * lay each of the 5 slots out block-diagonally in a (32, 128) bf16 tile:
        conv block at [0:16, 0:16], linear block at [16:32, 16:32]."""
    conv_f = [conv_w[0] @ conv_w[1], conv_w[2], conv_w[3], conv_w[4],
              conv_w[5] @ conv_w[6]]
    lin_f = [lin_w[0] @ lin_w[1], lin_w[2], jnp.eye(16, dtype=jnp.float32),
             lin_w[3], lin_w[4] @ lin_w[5]]

    def pack(cw, lw):
        blk = jnp.zeros((KPAD, CPAD), jnp.float32)
        blk = blk.at[:cw.shape[0], :cw.shape[1]].set(cw)
        blk = blk.at[LIN:LIN + lw.shape[0], LIN:LIN + lw.shape[1]].set(lw)
        return blk.astype(jnp.bfloat16)

    return jnp.stack([pack(c, l) for c, l in zip(conv_f, lin_f)])   # (5,32,128)


def reference_forward(x0, x1, g, loss, old_loss, conv_w, lin_w):
    """Pure-JAX f32 reference of the PyTorch module forward (unfused layers)."""
    gnorm = jnp.linalg.norm(g)
    g = jnp.where(gnorm > EPS, g / gnorm, g)
    m = x1 - x0
    mnorm = jnp.linalg.norm(m)
    m = jnp.where(mnorm > EPS, m / mnorm, m)

    feat = jnp.stack([jnp.log(1 + gnorm), jnp.log(1 + mnorm),
                      jnp.log(1 + loss), jnp.log(1 + old_loss)])
    y = feat @ lin_w[0] @ lin_w[1]
    y = jnp.maximum(y, 0.0) @ lin_w[2]
    y = jnp.maximum(y, 0.0) @ lin_w[3]
    y = jnp.maximum(y, 0.0) @ lin_w[4] @ lin_w[5]
    step_size = y[0]

    x_feat = jnp.stack([g, m, g * m], axis=1)           # (dim, 3)
    d = x_feat @ conv_w[0] @ conv_w[1]
    d = jnp.maximum(d, 0.0) @ conv_w[2]
    d = jnp.maximum(d, 0.0) @ conv_w[3]
    d = jnp.maximum(d, 0.0) @ conv_w[4]
    d = jnp.maximum(d, 0.0) @ conv_w[5] @ conv_w[6]
    return x1 - step_size * d[:, 0]


if __name__ == "__main__":
    key = jax.random.PRNGKey(0)
    k_m, k_c, k_x0, k_x1, k_w = jax.random.split(key, 5)

    # Synthetic quadratic loss f(x) = 0.5 (x-c)^T A (x-c), A PSD (opt_algo.loss_function)
    M = jax.random.normal(k_m, (DIM, DIM), jnp.float32)
    A = (M @ M.T) / DIM
    c = jax.random.normal(k_c, (DIM,), jnp.float32)

    x0 = jax.random.normal(k_x0, (DIM,), jnp.float32)   # current_state[0]
    x1 = jax.random.normal(k_x1, (DIM,), jnp.float32)   # current_state[1] / [-1]

    def loss_fn(x):
        r = x - c
        return 0.5 * r @ (A @ r)

    grad = A @ (x1 - c)          # loss_function.compute_gradient(current_state[1])
    loss = loss_fn(x1)
    old_loss = loss_fn(x0)

    conv_w, lin_w = init_module_weights(k_w)
    w = pack_params(conv_w, lin_w)

    new_iterate = quadratics_forward(x0, x1, grad, loss, old_loss, w)
    jax.block_until_ready(new_iterate)
    assert new_iterate.shape == (DIM,)

    ref = reference_forward(x0, x1, grad, loss, old_loss, conv_w, lin_w)
    assert jnp.allclose(new_iterate, ref, rtol=5e-2, atol=5e-2), (
        "max abs diff = %f" % float(jnp.max(jnp.abs(new_iterate - ref))))

    print("KERNEL_OK")
</pallas_src>

<mosaic_0001>
module attributes {stable_mosaic.version = 11 : i64} {
  func.func @quadratics_kernel(%arg0: memref<64x8xf32, #tpu.memory_space<vmem>>, %arg1: memref<2xf32, #tpu.memory_space<smem>>, %arg2: memref<5x32x128xbf16, #tpu.memory_space<vmem>>, %arg3: memref<64x1xf32, #tpu.memory_space<vmem>>) attributes {dimension_semantics = [], scalar_prefetch = 0 : i64, scratch_operands = 0 : i64, tpu.core_type = #tpu.core_type<tc>} {
    %c0 = arith.constant 0 : index
    %c0_0 = arith.constant 0 : index
    %0 = vector.load %arg0[%c0, %c0_0] : memref<64x8xf32, #tpu.memory_space<vmem>>, vector<64x8xf32>
    %1 = vector.extract_strided_slice %0 {offsets = [0, 0], sizes = [64, 1], strides = [1, 1]} : vector<64x8xf32> to vector<64x1xf32>
    %2 = vector.extract_strided_slice %0 {offsets = [0, 1], sizes = [64, 1], strides = [1, 1]} : vector<64x8xf32> to vector<64x1xf32>
    %3 = vector.extract_strided_slice %0 {offsets = [0, 2], sizes = [64, 1], strides = [1, 1]} : vector<64x8xf32> to vector<64x1xf32>
    %c0_1 = arith.constant 0 : index
    %4 = memref.load %arg1[%c0_1] : memref<2xf32, #tpu.memory_space<smem>>
    %c1 = arith.constant 1 : index
    %5 = memref.load %arg1[%c1] : memref<2xf32, #tpu.memory_space<smem>>
    %6 = arith.subf %2, %1 : vector<64x1xf32>
    %7 = tpu.iota {dimensions = array<i32: 1>} : vector<64x8xi32>
    %c0_i32 = arith.constant 0 : i32
    %8 = vector.broadcast %c0_i32 : i32 to vector<64x8xi32>
    %9 = arith.cmpi eq, %7, %8 : vector<64x8xi32>
    %cst = arith.constant 0.000000e+00 : f32
    %10 = vector.shape_cast %3 : vector<64x1xf32> to vector<64x1xf32>
    %11 = vector.broadcast %10 : vector<64x1xf32> to vector<64x8xf32>
    %12 = vector.broadcast %cst : f32 to vector<64x8xf32>
    %13 = arith.select %9, %11, %12 : vector<64x8xi1>, vector<64x8xf32>
    %c1_i32 = arith.constant 1 : i32
    %14 = vector.broadcast %c1_i32 : i32 to vector<64x8xi32>
    %15 = arith.cmpi eq, %7, %14 : vector<64x8xi32>
    %cst_2 = arith.constant 0.000000e+00 : f32
    %16 = vector.shape_cast %6 : vector<64x1xf32> to vector<64x1xf32>
    %17 = vector.broadcast %16 : vector<64x1xf32> to vector<64x8xf32>
    %18 = vector.broadcast %cst_2 : f32 to vector<64x8xf32>
    %19 = arith.select %15, %17, %18 : vector<64x8xi1>, vector<64x8xf32>
    %20 = arith.addf %13, %19 : vector<64x8xf32>
    %21 = arith.mulf %20, %20 : vector<64x8xf32>
    %cst_3 = arith.constant dense<0.000000e+00> : vector<8xf32>
    %22 = vector.multi_reduction <add>, %21, %cst_3 [0] : vector<64x8xf32> to vector<8xf32>
    %23 = vector.shape_cast %22 : vector<8xf32> to vector<1x8xf32>
    %24 = vector.extract_strided_slice %23 {offsets = [0, 0], sizes = [1, 1], strides = [1, 1]} : vector<1x8xf32> to vector<1x1xf32>
    %25 = vector.extract %24[0, 0] : f32 from vector<1x1xf32>
    %26 = vector.extract_strided_slice %23 {offsets = [0, 1], sizes = [1, 1], strides = [1, 1]} : vector<1x8xf32> to vector<1x1xf32>
    %27 = vector.extract %26[0, 0] : f32 from vector<1x1xf32>
    %28 = math.sqrt %25 : f32
    %29 = math.sqrt %27 : f32
    %cst_4 = arith.constant 9.99999968E-21 : f32
    %30 = arith.cmpf ogt, %28, %cst_4 : f32
    %31 = math.rsqrt %25 : f32
    %32 = vector.broadcast %31 : f32 to vector<64x1xf32>
    %33 = arith.mulf %3, %32 : vector<64x1xf32>
    %34 = arith.select %30, %33, %3 : vector<64x1xf32>
    %cst_5 = arith.constant 9.99999968E-21 : f32
    %35 = arith.cmpf ogt, %29, %cst_5 : f32
    %36 = math.rsqrt %27 : f32
    %37 = vector.broadcast %36 : f32 to vector<64x1xf32>
    %38 = arith.mulf %6, %37 : vector<64x1xf32>
    %39 = arith.select %35, %38, %6 : vector<64x1xf32>
    %40 = tpu.iota {dimensions = array<i32: 0>} : vector<64x32xi32>
    %41 = tpu.iota {dimensions = array<i32: 1>} : vector<64x32xi32>
    %c0_i32_6 = arith.constant 0 : i32
    %42 = vector.broadcast %c0_i32_6 : i32 to vector<64x32xi32>
    %43 = arith.cmpi eq, %41, %42 : vector<64x32xi32>
    %cst_7 = arith.constant 0.000000e+00 : f32
    %44 = vector.shape_cast %34 : vector<64x1xf32> to vector<64x1xf32>
    %45 = vector.broadcast %44 : vector<64x1xf32> to vector<64x32xf32>
    %46 = vector.broadcast %cst_7 : f32 to vector<64x32xf32>
    %47 = arith.select %43, %45, %46 : vector<64x32xi1>, vector<64x32xf32>
    %c1_i32_8 = arith.constant 1 : i32
    %48 = vector.broadcast %c1_i32_8 : i32 to vector<64x32xi32>
    %49 = arith.cmpi eq, %41, %48 : vector<64x32xi32>
    %cst_9 = arith.constant 0.000000e+00 : f32
    %50 = vector.shape_cast %39 : vector<64x1xf32> to vector<64x1xf32>
    %51 = vector.broadcast %50 : vector<64x1xf32> to vector<64x32xf32>
    %52 = vector.broadcast %cst_9 : f32 to vector<64x32xf32>
    %53 = arith.select %49, %51, %52 : vector<64x32xi1>, vector<64x32xf32>
    %54 = arith.addf %47, %53 : vector<64x32xf32>
    %c2_i32 = arith.constant 2 : i32
    %55 = vector.broadcast %c2_i32 : i32 to vector<64x32xi32>
    %56 = arith.cmpi eq, %41, %55 : vector<64x32xi32>
    %57 = arith.mulf %34, %39 : vector<64x1xf32>
    %cst_10 = arith.constant 0.000000e+00 : f32
    %58 = vector.shape_cast %57 : vector<64x1xf32> to vector<64x1xf32>
    %59 = vector.broadcast %58 : vector<64x1xf32> to vector<64x32xf32>
    %60 = vector.broadcast %cst_10 : f32 to vector<64x32xf32>
    %61 = arith.select %56, %59, %60 : vector<64x32xi1>, vector<64x32xf32>
    %62 = arith.addf %54, %61 : vector<64x32xf32>
    %c0_i32_11 = arith.constant 0 : i32
    %63 = vector.broadcast %c0_i32_11 : i32 to vector<64x32xi32>
    %64 = arith.cmpi eq, %40, %63 : vector<64x32xi32>
    %c16_i32 = arith.constant 16 : i32
    %65 = vector.broadcast %c16_i32 : i32 to vector<64x32xi32>
    %66 = arith.cmpi eq, %41, %65 : vector<64x32xi32>
    %c17_i32 = arith.constant 17 : i32
    %67 = vector.broadcast %c17_i32 : i32 to vector<64x32xi32>
    %68 = arith.cmpi eq, %41, %67 : vector<64x32xi32>
    %c18_i32 = arith.constant 18 : i32
    %69 = vector.broadcast %c18_i32 : i32 to vector<64x32xi32>
    %70 = arith.cmpi eq, %41, %69 : vector<64x32xi32>
    %c19_i32 = arith.constant 19 : i32
    %71 = vector.broadcast %c19_i32 : i32 to vector<64x32xi32>
    %72 = arith.cmpi eq, %41, %71 : vector<64x32xi32>
    %cst_12 = arith.constant 0.000000e+00 : f32
    %73 = vector.broadcast %5 : f32 to vector<64x32xf32>
    %74 = vector.broadcast %cst_12 : f32 to vector<64x32xf32>
    %75 = arith.select %72, %73, %74 : vector<64x32xi1>, vector<64x32xf32>
    %76 = vector.broadcast %4 : f32 to vector<64x32xf32>
    %77 = arith.select %70, %76, %75 : vector<64x32xi1>, vector<64x32xf32>
    %78 = vector.broadcast %29 : f32 to vector<64x32xf32>
    %79 = arith.select %68, %78, %77 : vector<64x32xi1>, vector<64x32xf32>
    %80 = vector.broadcast %28 : f32 to vector<64x32xf32>
    %81 = arith.select %66, %80, %79 : vector<64x32xi1>, vector<64x32xf32>
    %cst_13 = arith.constant 0.000000e+00 : f32
    %82 = vector.broadcast %cst_13 : f32 to vector<64x32xf32>
    %83 = arith.select %64, %81, %82 : vector<64x32xi1>, vector<64x32xf32>
    %cst_14 = arith.constant 1.000000e+00 : f32
    %84 = vector.broadcast %cst_14 : f32 to vector<64x32xf32>
    %85 = arith.addf %84, %83 : vector<64x32xf32>
    %86 = math.log %85 : vector<64x32xf32>
    %87 = arith.addf %62, %86 : vector<64x32xf32>
    %88 = arith.truncf %87 : vector<64x32xf32> to vector<64x32xbf16>
    %c0_15 = arith.constant 0 : index
    %c0_16 = arith.constant 0 : index
    %c0_17 = arith.constant 0 : index
    %89 = vector.load %arg2[%c0_15, %c0_16, %c0_17] : memref<5x32x128xbf16, #tpu.memory_space<vmem>>, vector<1x32x128xbf16>
    %90 = vector.shape_cast %89 : vector<1x32x128xbf16> to vector<32x128xbf16>
    %cst_18 = arith.constant dense<0.000000e+00> : vector<64x128xf32>
    %91 = tpu.matmul %88, %90, %cst_18 {dimension_numbers = #tpu.dot_dimension_numbers<[1], [0], [0], [1], [0, 0, 1, 1], [], []>} : vector<64x32xbf16>, vector<32x128xbf16>, vector<64x128xf32> -> vector<64x128xf32>
    %92 = vector.extract_strided_slice %91 {offsets = [0, 0], sizes = [64, 32], strides = [1, 1]} : vector<64x128xf32> to vector<64x32xf32>
    %cst_19 = arith.constant 0.000000e+00 : f32
    %93 = vector.broadcast %cst_19 : f32 to vector<64x32xf32>
    %94 = arith.maximumf %92, %93 : vector<64x32xf32>
    %95 = arith.truncf %94 : vector<64x32xf32> to vector<64x32xbf16>
    %c1_20 = arith.constant 1 : index
    %c0_21 = arith.constant 0 : index
    %c0_22 = arith.constant 0 : index
    %96 = vector.load %arg2[%c1_20, %c0_21, %c0_22] : memref<5x32x128xbf16, #tpu.memory_space<vmem>>, vector<1x32x128xbf16>
    %97 = vector.shape_cast %96 : vector<1x32x128xbf16> to vector<32x128xbf16>
    %cst_23 = arith.constant dense<0.000000e+00> : vector<64x128xf32>
    %98 = tpu.matmul %95, %97, %cst_23 {dimension_numbers = #tpu.dot_dimension_numbers<[1], [0], [0], [1], [0, 0, 1, 1], [], []>} : vector<64x32xbf16>, vector<32x128xbf16>, vector<64x128xf32> -> vector<64x128xf32>
    %99 = vector.extract_strided_slice %98 {offsets = [0, 0], sizes = [64, 32], strides = [1, 1]} : vector<64x128xf32> to vector<64x32xf32>
    %cst_24 = arith.constant 0.000000e+00 : f32
    %100 = vector.broadcast %cst_24 : f32 to vector<64x32xf32>
    %101 = arith.maximumf %99, %100 : vector<64x32xf32>
    %102 = arith.truncf %101 : vector<64x32xf32> to vector<64x32xbf16>
    %c2 = arith.constant 2 : index
    %c0_25 = arith.constant 0 : index
    %c0_26 = arith.constant 0 : index
    %103 = vector.load %arg2[%c2, %c0_25, %c0_26] : memref<5x32x128xbf16, #tpu.memory_space<vmem>>, vector<1x32x128xbf16>
    %104 = vector.shape_cast %103 : vector<1x32x128xbf16> to vector<32x128xbf16>
    %cst_27 = arith.constant dense<0.000000e+00> : vector<64x128xf32>
    %105 = tpu.matmul %102, %104, %cst_27 {dimension_numbers = #tpu.dot_dimension_numbers<[1], [0], [0], [1], [0, 0, 1, 1], [], []>} : vector<64x32xbf16>, vector<32x128xbf16>, vector<64x128xf32> -> vector<64x128xf32>
    %106 = vector.extract_strided_slice %105 {offsets = [0, 0], sizes = [64, 32], strides = [1, 1]} : vector<64x128xf32> to vector<64x32xf32>
    %cst_28 = arith.constant 0.000000e+00 : f32
    %107 = vector.broadcast %cst_28 : f32 to vector<64x32xf32>
    %108 = arith.maximumf %106, %107 : vector<64x32xf32>
    %109 = arith.truncf %108 : vector<64x32xf32> to vector<64x32xbf16>
    %c3 = arith.constant 3 : index
    %c0_29 = arith.constant 0 : index
    %c0_30 = arith.constant 0 : index
    %110 = vector.load %arg2[%c3, %c0_29, %c0_30] : memref<5x32x128xbf16, #tpu.memory_space<vmem>>, vector<1x32x128xbf16>
    %111 = vector.shape_cast %110 : vector<1x32x128xbf16> to vector<32x128xbf16>
    %cst_31 = arith.constant dense<0.000000e+00> : vector<64x128xf32>
    %112 = tpu.matmul %109, %111, %cst_31 {dimension_numbers = #tpu.dot_dimension_numbers<[1], [0], [0], [1], [0, 0, 1, 1], [], []>} : vector<64x32xbf16>, vector<32x128xbf16>, vector<64x128xf32> -> vector<64x128xf32>
    %113 = vector.extract_strided_slice %112 {offsets = [0, 0], sizes = [64, 32], strides = [1, 1]} : vector<64x128xf32> to vector<64x32xf32>
    %cst_32 = arith.constant 0.000000e+00 : f32
    %114 = vector.broadcast %cst_32 : f32 to vector<64x32xf32>
    %115 = arith.maximumf %113, %114 : vector<64x32xf32>
    %116 = arith.truncf %115 : vector<64x32xf32> to vector<64x32xbf16>
    %c4 = arith.constant 4 : index
    %c0_33 = arith.constant 0 : index
    %c0_34 = arith.constant 0 : index
    %117 = vector.load %arg2[%c4, %c0_33, %c0_34] : memref<5x32x128xbf16, #tpu.memory_space<vmem>>, vector<1x32x128xbf16>
    %118 = vector.shape_cast %117 : vector<1x32x128xbf16> to vector<32x128xbf16>
    %cst_35 = arith.constant dense<0.000000e+00> : vector<64x128xf32>
    %119 = tpu.matmul %116, %118, %cst_35 {dimension_numbers = #tpu.dot_dimension_numbers<[1], [0], [0], [1], [0, 0, 1, 1], [], []>} : vector<64x32xbf16>, vector<32x128xbf16>, vector<64x128xf32> -> vector<64x128xf32>
    %120 = vector.extract_strided_slice %119 {offsets = [0, 0], sizes = [64, 1], strides = [1, 1]} : vector<64x128xf32> to vector<64x1xf32>
    %121 = vector.extract_strided_slice %119 {offsets = [0, 16], sizes = [1, 1], strides = [1, 1]} : vector<64x128xf32> to vector<1x1xf32>
    %122 = vector.extract %121[0, 0] : f32 from vector<1x1xf32>
    %123 = vector.broadcast %122 : f32 to vector<64x1xf32>
    %124 = arith.mulf %123, %120 : vector<64x1xf32>
    %125 = arith.subf %2, %124 : vector<64x1xf32>
    %c0_36 = arith.constant 0 : index
    %c0_37 = arith.constant 0 : index
    %126 = vector.load %arg3[%c0_36, %c0_37] : memref<64x1xf32, #tpu.memory_space<vmem>>, vector<64x1xf32>
    tpu.vector_store %arg3[%c0_36, %c0_37], %125 {strides = array<i32>} : memref<64x1xf32, #tpu.memory_space<vmem>>, vector<64x1xf32>,
    return
  }
}

</mosaic_0001>

<llo_original>
// kernel: quadratics_forward.1
$region0: #{quadratics_forward.1}
  #allocation0 [shape = 'u32[]', space=smem, size = 0x4, offset = 0x4, fixed_abs, tag = 'smem constant byte address 0x4 - core index']
  #allocation1 [shape = 'u32[144,128]{1,0:T(1,128)}', space=vmem, size = 0x12000, scoped, tag = 'internal scratch']
  %s0 = inlined_call_operand.vmem [shape: f32[64,8], index: 0, kind: input, shape index: {}]
  %s1 = inlined_call_operand.vmem [shape: f32[2], index: 1, kind: input, shape index: {}]
  %s2 = inlined_call_operand.vmem [shape: bf16[5,32,128], index: 2, kind: input, shape index: {}]
  %s3 = inlined_call_operand.vmem [shape: f32[64,1], index: 3, kind: output, shape index: {}]
  %s4 = sld [smem:[#allocation0]]
  $region26: #{quadratics_forward.1} parent=0
    _
  %s6 = ssub.s32 1, %s4
  %s7 = scalar_select 0, %s6, %s4
  $region1: #{quadratics_forward.1} parent=0
    #allocation2 [shape = 'u8[512]{0}', space=smem, size = 0x200, scoped, tag = 'input window, operand 1, single buffered']
    #allocation3 [shape = 's32[1]{0}', space=sflag, size = 0x4, scoped, tag = 'scoped memory for quadratics_forward.1']
    %8 = vsyncpa [#allocation3], 0
    // Predicated region
    $region2: #{quadratics_forward.1} parent=1 // pred_check
      _
    $region3: #{quadratics_forward.1} parent=1 // pred_check_branch
      %10 = sbr.rel (0) target = $region5
    $region4: #{quadratics_forward.1} parent=1 // pred_region
      _
    $region5: #{quadratics_forward.1} parent=1 // pred_fallthru
      _
    // Predicated region
    $region6: #{quadratics_forward.1} parent=1 // pred_check
      _
    $region7: #{quadratics_forward.1} parent=1 // pred_check_branch
      %12 = sbr.rel (0) target = $region9
    $region8: #{quadratics_forward.1} parent=1 // pred_region
      %s14 = ssub.s32 16, 16
      %15 = vsyncadd [#allocation3], %s14
      %s17 = sshll.u32 %s1, 4
      %s18 = int_to_ptr.vmem [resolvable:$true] %s17
      %20 = dma.vmem_to_smem %s18, 16, [#allocation2], [#allocation3]
    $region9: #{quadratics_forward.1} parent=1 // pred_fallthru
      _
    // Predicated region
    $region10: #{quadratics_forward.1} parent=1 // pred_check
      _
    $region11: #{quadratics_forward.1} parent=1 // pred_check_branch
      %22 = sbr.rel (0) target = $region13
    $region12: #{quadratics_forward.1} parent=1 // pred_region
      _
    $region13: #{quadratics_forward.1} parent=1 // pred_fallthru
      _
    // Predicated region
    $region14: #{quadratics_forward.1} parent=1 // pred_check
      _
    $region15: #{quadratics_forward.1} parent=1 // pred_check_branch
      %24 = sbr.rel (0) target = $region17
    $region16: #{quadratics_forward.1} parent=1 // pred_region
      %25 = dma.done [#allocation3], 16
    $region17: #{quadratics_forward.1} parent=1 // pred_fallthru
      _
    %26 = sfence
    %v28 = vld [vmem:[%s0] sm:$0xff]
    %v29 = vld [vmem:[%s0 + $0x8] sm:$0xff]
    %v30 = vld [vmem:[%s0 + $0x10] sm:$0xff]
    %v31 = vld [vmem:[%s0 + $0x18] sm:$0xff]
    %v32 = vld [vmem:[%s0 + $0x20] sm:$0xff]
    %v33 = vld [vmem:[%s0 + $0x28] sm:$0xff]
    %v34 = vld [vmem:[%s0 + $0x30] sm:$0xff]
    %v35 = vld [vmem:[%s0 + $0x38] sm:$0xff]
    %s36 = sld [smem:[#allocation2]]
    %s37 = sld [smem:[#allocation2 + $0x1]]
    %46 = vrot.lane.b32.xlu0 %v28, 1
    %v47 = vpop.permute.xlu0 %46
    %48 = vrot.lane.b32.xlu0 %v29, 1
    %v49 = vpop.permute.xlu0 %48
    %50 = vrot.lane.b32.xlu0 %v30, 1
    %v51 = vpop.permute.xlu0 %50
    %52 = vrot.lane.b32.xlu0 %v31, 1
    %v53 = vpop.permute.xlu0 %52
    %54 = vrot.lane.b32.xlu0 %v32, 1
    %v55 = vpop.permute.xlu0 %54
    %56 = vrot.lane.b32.xlu0 %v33, 1
    %v57 = vpop.permute.xlu0 %56
    %58 = vrot.lane.b32.xlu0 %v34, 1
    %v59 = vpop.permute.xlu0 %58
    %60 = vrot.lane.b32.xlu0 %v35, 1
    %v61 = vpop.permute.xlu0 %60
    %v70 = vsub.f32 %v28, %v47
    %v71 = vsub.f32 %v29, %v49
    %v72 = vsub.f32 %v30, %v51
    %v73 = vsub.f32 %v31, %v53
    %v74 = vsub.f32 %v32, %v55
    %v75 = vsub.f32 %v33, %v57
    %v76 = vsub.f32 %v34, %v59
    %v77 = vsub.f32 %v35, %v61
    %v78 = vlaneseq
    %v79 = vand.u32 %v78, 127
    %vm80 = vcmp.eq.s32.totalorder %v79, 0
    %81 = vset.pattern.permute.xlu0 2
    %82 = vperm.xlu0 %81, %v28
    %v83 = vpop.permute.xlu0 %82
    %85 = vset.pattern.permute.xlu0 2
    %86 = vperm.xlu0 %85, %v29
    %v87 = vpop.permute.xlu0 %86
    %89 = vset.pattern.permute.xlu0 2
    %90 = vperm.xlu0 %89, %v30
    %v91 = vpop.permute.xlu0 %90
    %93 = vset.pattern.permute.xlu0 2
    %94 = vperm.xlu0 %93, %v31
    %v95 = vpop.permute.xlu0 %94
    %97 = vset.pattern.permute.xlu0 2
    %98 = vperm.xlu0 %97, %v32
    %v99 = vpop.permute.xlu0 %98
    %101 = vset.pattern.permute.xlu0 2
    %102 = vperm.xlu0 %101, %v33
    %v103 = vpop.permute.xlu0 %102
    %105 = vset.pattern.permute.xlu0 2
    %106 = vperm.xlu0 %105, %v34
    %v107 = vpop.permute.xlu0 %106
    %109 = vset.pattern.permute.xlu0 2
    %110 = vperm.xlu0 %109, %v35
    %v111 = vpop.permute.xlu0 %110
    %v113 = vsel %vm80, %v83, 0.0
    %v114 = vsel %vm80, %v87, 0.0
    %v115 = vsel %vm80, %v91, 0.0
    %v116 = vsel %vm80, %v95, 0.0
    %v117 = vsel %vm80, %v99, 0.0
    %v118 = vsel %vm80, %v103, 0.0
    %v119 = vsel %vm80, %v107, 0.0
    %v120 = vsel %vm80, %v111, 0.0
    %vm121 = vcmp.eq.s32.totalorder %v79, 1
    %123 = vset.pattern.permute.xlu0 1
    %124 = vperm.xlu0 %123, %v70
    %v125 = vpop.permute.xlu0 %124
    %128 = vset.pattern.permute.xlu0 1
    %129 = vperm.xlu0 %128, %v71
    %v130 = vpop.permute.xlu0 %129
    %133 = vset.pattern.permute.xlu0 1
    %134 = vperm.xlu0 %133, %v72
    %v135 = vpop.permute.xlu0 %134
    %138 = vset.pattern.permute.xlu0 1
    %139 = vperm.xlu0 %138, %v73
    %v140 = vpop.permute.xlu0 %139
    %143 = vset.pattern.permute.xlu0 1
    %144 = vperm.xlu0 %143, %v74
    %v145 = vpop.permute.xlu0 %144
    %148 = vset.pattern.permute.xlu0 1
    %149 = vperm.xlu0 %148, %v75
    %v150 = vpop.permute.xlu0 %149
    %153 = vset.pattern.permute.xlu0 1
    %154 = vperm.xlu0 %153, %v76
    %v155 = vpop.permute.xlu0 %154
    %158 = vset.pattern.permute.xlu0 1
    %159 = vperm.xlu0 %158, %v77
    %v160 = vpop.permute.xlu0 %159
    %v162 = vsel %vm121, %v125, 0.0
    %v163 = vsel %vm121, %v130, 0.0
    %v164 = vsel %vm121, %v135, 0.0
    %v165 = vsel %vm121, %v140, 0.0
    %v166 = vsel %vm121, %v145, 0.0
    %v167 = vsel %vm121, %v150, 0.0
    %v168 = vsel %vm121, %v155, 0.0
    %v169 = vsel %vm121, %v160, 0.0
    %v170 = vadd.f32 %v113, %v162
    %v171 = vadd.f32 %v114, %v163
    %v172 = vadd.f32 %v115, %v164
    %v173 = vadd.f32 %v116, %v165
    %v174 = vadd.f32 %v117, %v166
    %v175 = vadd.f32 %v118, %v167
    %v176 = vadd.f32 %v119, %v168
    %v177 = vadd.f32 %v120, %v169
    %v178 = vmul.f32 %v170, %v170
    %v179 = vmul.f32 %v171, %v171
    %v180 = vmul.f32 %v172, %v172
    %v181 = vmul.f32 %v173, %v173
    %v182 = vmul.f32 %v174, %v174
    %v183 = vmul.f32 %v175, %v175
    %v184 = vmul.f32 %v176, %v176
    %v185 = vmul.f32 %v177, %v177
    %vm186 = vcmask 64512
    %v187 = vsel %vm186, %v178, 0.0
    %v188 = vsel %vm186, %v179, 0.0
    %v189 = vadd.f32 %v187, %v188
    %v190 = vsel %vm186, %v180, 0.0
    %v191 = vadd.f32 %v189, %v190
    %v192 = vsel %vm186, %v181, 0.0
    %v193 = vadd.f32 %v191, %v192
    %v194 = vsel %vm186, %v182, 0.0
    %v195 = vadd.f32 %v193, %v194
    %v196 = vsel %vm186, %v183, 0.0
    %v197 = vadd.f32 %v195, %v196
    %v198 = vsel %vm186, %v184, 0.0
    %v199 = vadd.f32 %v197, %v198
    %v200 = vsel %vm186, %v185, 0.0
    %v201 = vadd.f32 %v199, %v200
    %v202 = vrot.slane %v201, 4
    %v203 = vadd.f32 %v201, %v202
    %v204 = vrot.slane %v203, 2
    %v205 = vadd.f32 %v203, %v204
    %v206 = vrot.slane %v205, 1
    %v207 = vadd.f32 %v205, %v206
    %s208 = vtos %v207
    %209 = vrot.lane.b32.xlu0 %v207, 127
    %v210 = vpop.permute.xlu0 %209
    %s211 = vtos %v210
    %v212 = vstv %s208
    %v213 = vrsqrt.pop %v212
    %v214 = vmul.f32 %v212, %v213
    %vm215 = vcmp.eq.f32.partialorder %v212, inf
    %v216 = vsel %vm215, %v212, %v214
    %vm217 = vcmp.eq.f32.partialorder %v212, 0.0
    %v218 = vand.u32 %v212, 2147483648
    %v219 = vsel %vm217, %v218, %v216
    %s220 = vtos %v219
    %v221 = vstv %s211
    %v222 = vrsqrt.pop %v221
    %v223 = vmul.f32 %v221, %v222
    %vm224 = vcmp.eq.f32.partialorder %v221, inf
    %v225 = vsel %vm224, %v221, %v223
    %vm226 = vcmp.eq.f32.partialorder %v221, 0.0
    %v227 = vand.u32 %v221, 2147483648
    %v228 = vsel %vm226, %v227, %v225
    %s229 = vtos %v228
    %p230 = scmp.gt.f32.partialorder %s220, 1e-20
    %v231 = vstv %s208
    %v232 = vrsqrt.pop %v231
    %s233 = vtos %v232
    %v234 = vstv %s233
    %v235 = vmul.f32 %v28, %v234
    %v236 = vmul.f32 %v29, %v234
    %v237 = vmul.f32 %v30, %v234
    %v238 = vmul.f32 %v31, %v234
    %v239 = vmul.f32 %v32, %v234
    %v240 = vmul.f32 %v33, %v234
    %v241 = vmul.f32 %v34, %v234
    %v242 = vmul.f32 %v35, %v234
    %s243 = scalar_select %p230, 1, 0
    %v244 = vstv %s243
    %vm245 = vcmp.eq.s32.totalorder %v244, 1
    %v246 = vsel %vm245, %v235, %v28
    %v247 = vsel %vm245, %v236, %v29
    %v248 = vsel %vm245, %v237, %v30
    %v249 = vsel %vm245, %v238, %v31
    %v250 = vsel %vm245, %v239, %v32
    %v251 = vsel %vm245, %v240, %v33
    %v252 = vsel %vm245, %v241, %v34
    %v253 = vsel %vm245, %v242, %v35
    %p254 = scmp.gt.f32.partialorder %s229, 1e-20
    %v255 = vstv %s211
    %v256 = vrsqrt.pop %v255
    %s257 = vtos %v256
    %v258 = vstv %s257
    %v259 = vmul.f32 %v70, %v258
    %v260 = vmul.f32 %v71, %v258
    %v261 = vmul.f32 %v72, %v258
    %v262 = vmul.f32 %v73, %v258
    %v263 = vmul.f32 %v74, %v258
    %v264 = vmul.f32 %v75, %v258
    %v265 = vmul.f32 %v76, %v258
    %v266 = vmul.f32 %v77, %v258
    %s267 = scalar_select %p254, 1, 0
    %v268 = vstv %s267
    %vm269 = vcmp.eq.s32.totalorder %v268, 1
    %v270 = vsel %vm269, %v259, %v70
    %v271 = vsel %vm269, %v260, %v71
    %v272 = vsel %vm269, %v261, %v72
    %v273 = vsel %vm269, %v262, %v73
    %v274 = vsel %vm269, %v263, %v74
    %v275 = vsel %vm269, %v264, %v75
    %v276 = vsel %vm269, %v265, %v76
    %v277 = vsel %vm269, %v266, %v77
    %v278 = vlaneseq
    %v279 = vshrl.u32 %v278, 7
    %v280 = vadd.s32 %v279, 8
    %v281 = vadd.s32 %v279, 16
    %v282 = vadd.s32 %v279, 24
    %v283 = vadd.s32 %v279, 32
    %v284 = vadd.s32 %v279, 40
    %v285 = vadd.s32 %v279, 48
    %v286 = vadd.s32 %v279, 56
    %288 = vset.pattern.permute.xlu0 2
    %289 = vperm.xlu0 %288, %v246
    %v290 = vpop.permute.xlu0 %289
    %293 = vset.pattern.permute.xlu0 2
    %294 = vperm.xlu0 %293, %v247
    %v295 = vpop.permute.xlu0 %294
    %298 = vset.pattern.permute.xlu0 2
    %299 = vperm.xlu0 %298, %v248
    %v300 = vpop.permute.xlu0 %299
    %303 = vset.pattern.permute.xlu0 2
    %304 = vperm.xlu0 %303, %v249
    %v305 = vpop.permute.xlu0 %304
    %308 = vset.pattern.permute.xlu0 2
    %309 = vperm.xlu0 %308, %v250
    %v310 = vpop.permute.xlu0 %309
    %313 = vset.pattern.permute.xlu0 2
    %314 = vperm.xlu0 %313, %v251
    %v315 = vpop.permute.xlu0 %314
    %318 = vset.pattern.permute.xlu0 2
    %319 = vperm.xlu0 %318, %v252
    %v320 = vpop.permute.xlu0 %319
    %323 = vset.pattern.permute.xlu0 2
    %324 = vperm.xlu0 %323, %v253
    %v325 = vpop.permute.xlu0 %324
    %v327 = vsel %vm80, %v290, 0.0
    %v328 = vsel %vm80, %v295, 0.0
    %v329 = vsel %vm80, %v300, 0.0
    %v330 = vsel %vm80, %v305, 0.0
    %v331 = vsel %vm80, %v310, 0.0
    %v332 = vsel %vm80, %v315, 0.0
    %v333 = vsel %vm80, %v320, 0.0
    %v334 = vsel %vm80, %v325, 0.0
    %336 = vset.pattern.permute.xlu0 1
    %337 = vperm.xlu0 %336, %v270
    %v338 = vpop.permute.xlu0 %337
    %341 = vset.pattern.permute.xlu0 1
    %342 = vperm.xlu0 %341, %v271
    %v343 = vpop.permute.xlu0 %342
    %346 = vset.pattern.permute.xlu0 1
    %347 = vperm.xlu0 %346, %v272
    %v348 = vpop.permute.xlu0 %347
    %351 = vset.pattern.permute.xlu0 1
    %352 = vperm.xlu0 %351, %v273
    %v353 = vpop.permute.xlu0 %352
    %356 = vset.pattern.permute.xlu0 1
    %357 = vperm.xlu0 %356, %v274
    %v358 = vpop.permute.xlu0 %357
    %361 = vset.pattern.permute.xlu0 1
    %362 = vperm.xlu0 %361, %v275
    %v363 = vpop.permute.xlu0 %362
    %366 = vset.pattern.permute.xlu0 1
    %367 = vperm.xlu0 %366, %v276
    %v368 = vpop.permute.xlu0 %367
    %371 = vset.pattern.permute.xlu0 1
    %372 = vperm.xlu0 %371, %v277
    %v373 = vpop.permute.xlu0 %372
    %v375 = vsel %vm121, %v338, 0.0
    %v376 = vsel %vm121, %v343, 0.0
    %v377 = vsel %vm121, %v348, 0.0
    %v378 = vsel %vm121, %v353, 0.0
    %v379 = vsel %vm121, %v358, 0.0
    %v380 = vsel %vm121, %v363, 0.0
    %v381 = vsel %vm121, %v368, 0.0
    %v382 = vsel %vm121, %v373, 0.0
    %v383 = vadd.f32 %v327, %v375
    %v384 = vadd.f32 %v328, %v376
    %v385 = vadd.f32 %v329, %v377
    %v386 = vadd.f32 %v330, %v378
    %v387 = vadd.f32 %v331, %v379
    %v388 = vadd.f32 %v332, %v380
    %v389 = vadd.f32 %v333, %v381
    %v390 = vadd.f32 %v334, %v382
    %vm391 = vcmp.eq.s32.totalorder %v79, 2
    %392 = vrot.lane.b32.xlu0 %v270, 1
    %v393 = vpop.permute.xlu0 %392
    %394 = vrot.lane.b32.xlu0 %v271, 1
    %v395 = vpop.permute.xlu0 %394
    %396 = vrot.lane.b32.xlu0 %v272, 1
    %v397 = vpop.permute.xlu0 %396
    %398 = vrot.lane.b32.xlu0 %v273, 1
    %v399 = vpop.permute.xlu0 %398
    %400 = vrot.lane.b32.xlu0 %v274, 1
    %v401 = vpop.permute.xlu0 %400
    %402 = vrot.lane.b32.xlu0 %v275, 1
    %v403 = vpop.permute.xlu0 %402
    %404 = vrot.lane.b32.xlu0 %v276, 1
    %v405 = vpop.permute.xlu0 %404
    %406 = vrot.lane.b32.xlu0 %v277, 1
    %v407 = vpop.permute.xlu0 %406
    %v416 = vmul.f32 %v246, %v393
    %v417 = vmul.f32 %v247, %v395
    %v418 = vmul.f32 %v248, %v397
    %v419 = vmul.f32 %v249, %v399
    %v420 = vmul.f32 %v250, %v401
    %v421 = vmul.f32 %v251, %v403
    %v422 = vmul.f32 %v252, %v405
    %v423 = vmul.f32 %v253, %v407
    %425 = vset.pattern.permute.xlu0 2
    %426 = vperm.xlu0 %425, %v416
    %v427 = vpop.permute.xlu0 %426
    %430 = vset.pattern.permute.xlu0 2
    %431 = vperm.xlu0 %430, %v417
    %v432 = vpop.permute.xlu0 %431
    %435 = vset.pattern.permute.xlu0 2
    %436 = vperm.xlu0 %435, %v418
    %v437 = vpop.permute.xlu0 %436
    %440 = vset.pattern.permute.xlu0 2
    %441 = vperm.xlu0 %440, %v419
    %v442 = vpop.permute.xlu0 %441
    %445 = vset.pattern.permute.xlu0 2
    %446 = vperm.xlu0 %445, %v420
    %v447 = vpop.permute.xlu0 %446
    %450 = vset.pattern.permute.xlu0 2
    %451 = vperm.xlu0 %450, %v421
    %v452 = vpop.permute.xlu0 %451
    %455 = vset.pattern.permute.xlu0 2
    %456 = vperm.xlu0 %455, %v422
    %v457 = vpop.permute.xlu0 %456
    %460 = vset.pattern.permute.xlu0 2
    %461 = vperm.xlu0 %460, %v423
    %v462 = vpop.permute.xlu0 %461
    %v464 = vsel %vm391, %v427, 0.0
    %v465 = vsel %vm391, %v432, 0.0
    %v466 = vsel %vm391, %v437, 0.0
    %v467 = vsel %vm391, %v442, 0.0
    %v468 = vsel %vm391, %v447, 0.0
    %v469 = vsel %vm391, %v452, 0.0
    %v470 = vsel %vm391, %v457, 0.0
    %v471 = vsel %vm391, %v462, 0.0
    %v472 = vadd.f32 %v383, %v464
    %v473 = vadd.f32 %v384, %v465
    %v474 = vadd.f32 %v385, %v466
    %v475 = vadd.f32 %v386, %v467
    %v476 = vadd.f32 %v387, %v468
    %v477 = vadd.f32 %v388, %v469
    %v478 = vadd.f32 %v389, %v470
    %v479 = vadd.f32 %v390, %v471
    %vm480 = vcmp.eq.s32.totalorder %v279, 0
    %vm481 = vcmp.eq.s32.totalorder %v280, 0
    %vm482 = vcmp.eq.s32.totalorder %v281, 0
    %vm483 = vcmp.eq.s32.totalorder %v282, 0
    %vm484 = vcmp.eq.s32.totalorder %v283, 0
    %vm485 = vcmp.eq.s32.totalorder %v284, 0
    %vm486 = vcmp.eq.s32.totalorder %v285, 0
    %vm487 = vcmp.eq.s32.totalorder %v286, 0
    %vm488 = vcmp.eq.s32.totalorder %v79, 16
    %vm489 = vcmp.eq.s32.totalorder %v79, 17
    %vm490 = vcmp.eq.s32.totalorder %v79, 18
    %vm491 = vcmp.eq.s32.totalorder %v79, 19
    %v492 = vstv %s37
    %v493 = vsel %vm491, %v492, 0.0
    %v494 = vstv %s36
    %v495 = vsel %vm490, %v494, %v493
    %v496 = vstv %s229
    %v497 = vsel %vm489, %v496, %v495
    %v498 = vstv %s220
    %v499 = vsel %vm488, %v498, %v497
    %v500 = vsel %vm480, %v499, 0.0
    %v501 = vsel %vm481, %v499, 0.0
    %v502 = vsel %vm482, %v499, 0.0
    %v503 = vsel %vm483, %v499, 0.0
    %v504 = vsel %vm484, %v499, 0.0
    %v505 = vsel %vm485, %v499, 0.0
    %v506 = vsel %vm486, %v499, 0.0
    %v507 = vsel %vm487, %v499, 0.0
    %v508 = vadd.f32 %v500, 1.0
    %v509 = vadd.f32 %v501, 1.0
    %v510 = vadd.f32 %v502, 1.0
    %v511 = vadd.f32 %v503, 1.0
    %v512 = vadd.f32 %v504, 1.0
    %v513 = vadd.f32 %v505, 1.0
    %v514 = vadd.f32 %v506, 1.0
    %v515 = vadd.f32 %v507, 1.0
    %v516 = vlog2.pop %v508
    %v517 = vmul.f32 %v516, 0.6931472
    %v518 = vlog2.pop %v509
    %v519 = vmul.f32 %v518, 0.6931472
    %v520 = vlog2.pop %v510
    %v521 = vmul.f32 %v520, 0.6931472
    %v522 = vlog2.pop %v511
    %v523 = vmul.f32 %v522, 0.6931472
    %v524 = vlog2.pop %v512
    %v525 = vmul.f32 %v524, 0.6931472
    %v526 = vlog2.pop %v513
    %v527 = vmul.f32 %v526, 0.6931472
    %v528 = vlog2.pop %v514
    %v529 = vmul.f32 %v528, 0.6931472
    %v530 = vlog2.pop %v515
    %v531 = vmul.f32 %v530, 0.6931472
    %v532 = vadd.f32 %v472, %v517
    %v533 = vadd.f32 %v473, %v519
    %v534 = vadd.f32 %v474, %v521
    %v535 = vadd.f32 %v475, %v523
    %v536 = vadd.f32 %v476, %v525
    %v537 = vadd.f32 %v477, %v527
    %v538 = vadd.f32 %v478, %v529
    %v539 = vadd.f32 %v479, %v531
    %v540 = vpack.c.bf16 %v533, %v532
    %v541 = vpack.c.bf16 %v535, %v534
    %v542 = vpack.c.bf16 %v537, %v536
    %v543 = vpack.c.bf16 %v539, %v538
    %v544 = vld [vmem:[%s2] sm:$0xf]
    %v545 = vld [vmem:[%s2 + $0x4] sm:$0xf]
    %v546 = vld [vmem:[%s2 + $0x8] sm:$0xf]
    %v547 = vld [vmem:[%s2 + $0xc] sm:$0xf]
    %v552 = vunpack.c.l.b16 %v544
    %v553 = vunpack.c.l.b16 %v545
    %v554 = vunpack.c.l.b16 %v546
    %v555 = vunpack.c.l.b16 %v547
    %v556 = vpack.c.b16 %v553, %v552
    %v557 = vpack.c.b16 %v555, %v554
    %vm560 = vcmask 261120
    %v562 = vsel %vm560, %v540, 0
    %v565 = vsel %vm560, %v541, 0
    %v568 = vsel %vm560, %v542, 0
    %v571 = vsel %vm560, %v543, 0
    %573 = vmatprep.subr.bf16.mxu0 0
    %574 = vmatpush1.bf16.msra.mxu0 %v556
    %575 = vmatprep.subr.bf16.mxu0 0
    %576 = vmatpush1.bf16.msra.mxu0 %v557
    %577 = vmatprep.subr.bf16.mxu0 0
    %578 = vmatpush1.bf16.msra.mxu0 0
    %579 = vmatprep.subr.bf16.mxu0 0
    %580 = vmatpush1.bf16.msra.mxu0 0
    %581 = vmatprep.subr.bf16.mxu0 0
    %582 = vmatpush1.bf16.msra.mxu0 0
    %583 = vmatprep.subr.bf16.mxu0 0
    %584 = vmatpush1.bf16.msra.mxu0 0
    %585 = vmatprep.subr.bf16.mxu0 0
    %586 = vmatpush1.bf16.msra.mxu0 0
    %587 = vmatprep.subr.bf16.mxu0 0
    %588 = vmatpush1.bf16.msra.mxu0 0
    %589 = vmatprep.subr.bf16.mxu0 0
    %590 = vmatpush1.bf16.msra.mxu0 0
    %591 = vmatprep.subr.bf16.mxu0 0
    %592 = vmatpush1.bf16.msra.mxu0 0
    %593 = vmatprep.subr.bf16.mxu0 0
    %594 = vmatpush1.bf16.msra.mxu0 0
    %595 = vmatprep.subr.bf16.mxu0 0
    %596 = vmatpush1.bf16.msra.mxu0 0
    %597 = vmatprep.subr.bf16.mxu0 0
    %598 = vmatpush1.bf16.msra.mxu0 0
    %599 = vmatprep.subr.bf16.mxu0 0
    %600 = vmatpush1.bf16.msra.mxu0 0
    %601 = vmatprep.subr.bf16.mxu0 0
    %602 = vmatpush1.bf16.msra.mxu0 0
    %603 = vmatprep.subr.bf16.mxu0 0
    %604 = vmatpush1.bf16.msra.mxu0 0
    %605 = vmatprep.mubr.bf16.mxu0 0
    %606 = vmatmul.mubr.bf16.gmra.mrb[0].mxu0 %v562
    %v607 = vpop.f32.mrb[0].mxu0
    %v608 = vadd.f32 0.0, %v607
    %v609 = vpop.f32.mrb[0].mxu0
    %v610 = vpop.f32.mrb[0].mxu0
    %v611 = vadd.f32 0.0, %v610
    %v612 = vpop.f32.mrb[0].mxu0
    %613 = vmatprep.mubr.bf16.mxu0 0
    %614 = vmatmul.mubr.bf16.gmra.mrb[0].mxu0 %v565
    %v615 = vpop.f32.mrb[0].mxu0
    %v616 = vadd.f32 0.0, %v615
    %v617 = vpop.f32.mrb[0].mxu0
    %v618 = vpop.f32.mrb[0].mxu0
    %v619 = vadd.f32 0.0, %v618
    %v620 = vpop.f32.mrb[0].mxu0
    %621 = vmatprep.mubr.bf16.mxu0 0
    %622 = vmatmul.mubr.bf16.gmra.mrb[0].mxu0 %v568
    %v623 = vpop.f32.mrb[0].mxu0
    %v624 = vadd.f32 0.0, %v623
    %v625 = vpop.f32.mrb[0].mxu0
    %v626 = vpop.f32.mrb[0].mxu0
    %v627 = vadd.f32 0.0, %v626
    %v628 = vpop.f32.mrb[0].mxu0
    %629 = vmatprep.mubr.bf16.mxu0 0
    %630 = vmatmul.mubr.bf16.gmra.mrb[0].mxu0 %v571
    %v631 = vpop.f32.mrb[0].mxu0
    %v632 = vadd.f32 0.0, %v631
    %v633 = vpop.f32.mrb[0].mxu0
    %v634 = vpop.f32.mrb[0].mxu0
    %v635 = vadd.f32 0.0, %v634
    %v636 = vpop.f32.mrb[0].mxu0
    %637 = vdwg.mxu0
    %v638 = vmax.f32 %v608, 0.0
    %v639 = vmax.f32 %v611, 0.0
    %v640 = vmax.f32 %v616, 0.0
    %v641 = vmax.f32 %v619, 0.0
    %v642 = vmax.f32 %v624, 0.0
    %v643 = vmax.f32 %v627, 0.0
    %v644 = vmax.f32 %v632, 0.0
    %v645 = vmax.f32 %v635, 0.0
    %v646 = vpack.c.bf16 %v639, %v638
    %v647 = vpack.c.bf16 %v641, %v640
    %v648 = vpack.c.bf16 %v643, %v642
    %v649 = vpack.c.bf16 %v645, %v644
    %s650 = scalar_lea.vmem %s2, 16
    %v651 = vld [vmem:[%s650] sm:$0xf]
    %v652 = vld [vmem:[%s650 + $0x4] sm:$0xf]
    %v653 = vld [vmem:[%s650 + $0x8] sm:$0xf]
    %v654 = vld [vmem:[%s650 + $0xc] sm:$0xf]
    %v659 = vunpack.c.l.b16 %v651
    %v660 = vunpack.c.l.b16 %v652
    %v661 = vunpack.c.l.b16 %v653
    %v662 = vunpack.c.l.b16 %v654
    %v663 = vpack.c.b16 %v660, %v659
    %v664 = vpack.c.b16 %v662, %v661
    %v668 = vsel %vm560, %v646, 0
    %v671 = vsel %vm560, %v647, 0
    %v674 = vsel %vm560, %v648, 0
    %v677 = vsel %vm560, %v649, 0
    %679 = vmatprep.subr.bf16.mxu0 0
    %680 = vmatpush1.bf16.msra.mxu0 %v663
    %681 = vmatprep.subr.bf16.mxu0 0
    %682 = vmatpush1.bf16.msra.mxu0 %v664
    %683 = vmatprep.subr.bf16.mxu0 0
    %684 = vmatpush1.bf16.msra.mxu0 0
    %685 = vmatprep.subr.bf16.mxu0 0
    %686 = vmatpush1.bf16.msra.mxu0 0
    %687 = vmatprep.subr.bf16.mxu0 0
    %688 = vmatpush1.bf16.msra.mxu0 0
    %689 = vmatprep.subr.bf16.mxu0 0
    %690 = vmatpush1.bf16.msra.mxu0 0
    %691 = vmatprep.subr.bf16.mxu0 0
    %692 = vmatpush1.bf16.msra.mxu0 0
    %693 = vmatprep.subr.bf16.mxu0 0
    %694 = vmatpush1.bf16.msra.mxu0 0
    %695 = vmatprep.subr.bf16.mxu0 0
    %696 = vmatpush1.bf16.msra.mxu0 0
    %697 = vmatprep.subr.bf16.mxu0 0
    %698 = vmatpush1.bf16.msra.mxu0 0
    %699 = vmatprep.subr.bf16.mxu0 0
    %700 = vmatpush1.bf16.msra.mxu0 0
    %701 = vmatprep.subr.bf16.mxu0 0
    %702 = vmatpush1.bf16.msra.mxu0 0
    %703 = vmatprep.subr.bf16.mxu0 0
    %704 = vmatpush1.bf16.msra.mxu0 0
    %705 = vmatprep.subr.bf16.mxu0 0
    %706 = vmatpush1.bf16.msra.mxu0 0
    %707 = vmatprep.subr.bf16.mxu0 0
    %708 = vmatpush1.bf16.msra.mxu0 0
    %709 = vmatprep.subr.bf16.mxu0 0
    %710 = vmatpush1.bf16.msra.mxu0 0
    %711 = vmatprep.mubr.bf16.mxu0 0
    %712 = vmatmul.mubr.bf16.gmra.mrb[0].mxu0 %v668
    %v713 = vpop.f32.mrb[0].mxu0
    %v714 = vadd.f32 0.0, %v713
    %v715 = vpop.f32.mrb[0].mxu0
    %v716 = vpop.f32.mrb[0].mxu0
    %v717 = vadd.f32 0.0, %v716
    %v718 = vpop.f32.mrb[0].mxu0
    %719 = vmatprep.mubr.bf16.mxu0 0
    %720 = vmatmul.mubr.bf16.gmra.mrb[0].mxu0 %v671
    %v721 = vpop.f32.mrb[0].mxu0
    %v722 = vadd.f32 0.0, %v721
    %v723 = vpop.f32.mrb[0].mxu0
    %v724 = vpop.f32.mrb[0].mxu0
    %v725 = vadd.f32 0.0, %v724
    %v726 = vpop.f32.mrb[0].mxu0
    %727 = vmatprep.mubr.bf16.mxu0 0
    %728 = vmatmul.mubr.bf16.gmra.mrb[0].mxu0 %v674
    %v729 = vpop.f32.mrb[0].mxu0
    %v730 = vadd.f32 0.0, %v729
    %v731 = vpop.f32.mrb[0].mxu0
    %v732 = vpop.f32.mrb[0].mxu0
    %v733 = vadd.f32 0.0, %v732
    %v734 = vpop.f32.mrb[0].mxu0
    %735 = vmatprep.mubr.bf16.mxu0 0
    %736 = vmatmul.mubr.bf16.gmra.mrb[0].mxu0 %v677
    %v737 = vpop.f32.mrb[0].mxu0
    %v738 = vadd.f32 0.0, %v737
    %v739 = vpop.f32.mrb[0].mxu0
    %v740 = vpop.f32.mrb[0].mxu0
    %v741 = vadd.f32 0.0, %v740
    %v742 = vpop.f32.mrb[0].mxu0
    %743 = vdwg.mxu0
    %v744 = vmax.f32 %v714, 0.0
    %v745 = vmax.f32 %v717, 0.0
    %v746 = vmax.f32 %v722, 0.0
    %v747 = vmax.f32 %v725, 0.0
    %v748 = vmax.f32 %v730, 0.0
    %v749 = vmax.f32 %v733, 0.0
    %v750 = vmax.f32 %v738, 0.0
    %v751 = vmax.f32 %v741, 0.0
    %v752 = vpack.c.bf16 %v745, %v744
    %v753 = vpack.c.bf16 %v747, %v746
    %v754 = vpack.c.bf16 %v749, %v748
    %v755 = vpack.c.bf16 %v751, %v750
    %s756 = scalar_lea.vmem %s2, 32
    %v757 = vld [vmem:[%s756] sm:$0xf]
    %v758 = vld [vmem:[%s756 + $0x4] sm:$0xf]
    %v759 = vld [vmem:[%s756 + $0x8] sm:$0xf]
    %v760 = vld [vmem:[%s756 + $0xc] sm:$0xf]
    %v765 = vunpack.c.l.b16 %v757
    %v766 = vunpack.c.l.b16 %v758
    %v767 = vunpack.c.l.b16 %v759
    %v768 = vunpack.c.l.b16 %v760
    %v769 = vpack.c.b16 %v766, %v765
    %v770 = vpack.c.b16 %v768, %v767
    %v774 = vsel %vm560, %v752, 0
    %v777 = vsel %vm560, %v753, 0
    %v780 = vsel %vm560, %v754, 0
    %v783 = vsel %vm560, %v755, 0
    %785 = vmatprep.subr.bf16.mxu0 0
    %786 = vmatpush1.bf16.msra.mxu0 %v769
    %787 = vmatprep.subr.bf16.mxu0 0
    %788 = vmatpush1.bf16.msra.mxu0 %v770
    %789 = vmatprep.subr.bf16.mxu0 0
    %790 = vmatpush1.bf16.msra.mxu0 0
    %791 = vmatprep.subr.bf16.mxu0 0
    %792 = vmatpush1.bf16.msra.mxu0 0
    %793 = vmatprep.subr.bf16.mxu0 0
    %794 = vmatpush1.bf16.msra.mxu0 0
    %795 = vmatprep.subr.bf16.mxu0 0
    %796 = vmatpush1.bf16.msra.mxu0 0
    %797 = vmatprep.subr.bf16.mxu0 0
    %798 = vmatpush1.bf16.msra.mxu0 0
    %799 = vmatprep.subr.bf16.mxu0 0
    %800 = vmatpush1.bf16.msra.mxu0 0
    %801 = vmatprep.subr.bf16.mxu0 0
    %802 = vmatpush1.bf16.msra.mxu0 0
    %803 = vmatprep.subr.bf16.mxu0 0
    %804 = vmatpush1.bf16.msra.mxu0 0
    %805 = vmatprep.subr.bf16.mxu0 0
    %806 = vmatpush1.bf16.msra.mxu0 0
    %807 = vmatprep.subr.bf16.mxu0 0
    %808 = vmatpush1.bf16.msra.mxu0 0
    %809 = vmatprep.subr.bf16.mxu0 0
    %810 = vmatpush1.bf16.msra.mxu0 0
    %811 = vmatprep.subr.bf16.mxu0 0
    %812 = vmatpush1.bf16.msra.mxu0 0
    %813 = vmatprep.subr.bf16.mxu0 0
    %814 = vmatpush1.bf16.msra.mxu0 0
    %815 = vmatprep.subr.bf16.mxu0 0
    %816 = vmatpush1.bf16.msra.mxu0 0
    %817 = vmatprep.mubr.bf16.mxu0 0
    %818 = vmatmul.mubr.bf16.gmra.mrb[0].mxu0 %v774
    %v819 = vpop.f32.mrb[0].mxu0
    %v820 = vadd.f32 0.0, %v819
    %v821 = vpop.f32.mrb[0].mxu0
    %v822 = vpop.f32.mrb[0].mxu0
    %v823 = vadd.f32 0.0, %v822
    %v824 = vpop.f32.mrb[0].mxu0
    %825 = vmatprep.mubr.bf16.mxu0 0
    %826 = vmatmul.mubr.bf16.gmra.mrb[0].mxu0 %v777
    %v827 = vpop.f32.mrb[0].mxu0
    %v828 = vadd.f32 0.0, %v827
    %v829 = vpop.f32.mrb[0].mxu0
    %v830 = vpop.f32.mrb[0].mxu0
    %v831 = vadd.f32 0.0, %v830
    %v832 = vpop.f32.mrb[0].mxu0
    %833 = vmatprep.mubr.bf16.mxu0 0
    %834 = vmatmul.mubr.bf16.gmra.mrb[0].mxu0 %v780
    %v835 = vpop.f32.mrb[0].mxu0
    %v836 = vadd.f32 0.0, %v835
    %v837 = vpop.f32.mrb[0].mxu0
    %v838 = vpop.f32.mrb[0].mxu0
    %v839 = vadd.f32 0.0, %v838
    %v840 = vpop.f32.mrb[0].mxu0
    %841 = vmatprep.mubr.bf16.mxu0 0
    %842 = vmatmul.mubr.bf16.gmra.mrb[0].mxu0 %v783
    %v843 = vpop.f32.mrb[0].mxu0
    %v844 = vadd.f32 0.0, %v843
    %v845 = vpop.f32.mrb[0].mxu0
    %v846 = vpop.f32.mrb[0].mxu0
    %v847 = vadd.f32 0.0, %v846
    %v848 = vpop.f32.mrb[0].mxu0
    %849 = vdwg.mxu0
    %v850 = vmax.f32 %v820, 0.0
    %v851 = vmax.f32 %v823, 0.0
    %v852 = vmax.f32 %v828, 0.0
    %v853 = vmax.f32 %v831, 0.0
    %v854 = vmax.f32 %v836, 0.0
    %v855 = vmax.f32 %v839, 0.0
    %v856 = vmax.f32 %v844, 0.0
    %v857 = vmax.f32 %v847, 0.0
    %v858 = vpack.c.bf16 %v851, %v850
    %v859 = vpack.c.bf16 %v853, %v852
    %v860 = vpack.c.bf16 %v855, %v854
    %v861 = vpack.c.bf16 %v857, %v856
    %s862 = scalar_lea.vmem %s2, 48
    %v863 = vld [vmem:[%s862] sm:$0xf]
    %v864 = vld [vmem:[%s862 + $0x4] sm:$0xf]
    %v865 = vld [vmem:[%s862 + $0x8] sm:$0xf]
    %v866 = vld [vmem:[%s862 + $0xc] sm:$0xf]
    %v871 = vunpack.c.l.b16 %v863
    %v872 = vunpack.c.l.b16 %v864
    %v873 = vunpack.c.l.b16 %v865
    %v874 = vunpack.c.l.b16 %v866
    %v875 = vpack.c.b16 %v872, %v871
    %v876 = vpack.c.b16 %v874, %v873
    %v880 = vsel %vm560, %v858, 0
    %v883 = vsel %vm560, %v859, 0
    %v886 = vsel %vm560, %v860, 0
    %v889 = vsel %vm560, %v861, 0
    %891 = vmatprep.subr.bf16.mxu0 0
    %892 = vmatpush1.bf16.msra.mxu0 %v875
    %893 = vmatprep.subr.bf16.mxu0 0
    %894 = vmatpush1.bf16.msra.mxu0 %v876
    %895 = vmatprep.subr.bf16.mxu0 0
    %896 = vmatpush1.bf16.msra.mxu0 0
    %897 = vmatprep.subr.bf16.mxu0 0
    %898 = vmatpush1.bf16.msra.mxu0 0
    %899 = vmatprep.subr.bf16.mxu0 0
    %900 = vmatpush1.bf16.msra.mxu0 0
    %901 = vmatprep.subr.bf16.mxu0 0
    %902 = vmatpush1.bf16.msra.mxu0 0
    %903 = vmatprep.subr.bf16.mxu0 0
    %904 = vmatpush1.bf16.msra.mxu0 0
    %905 = vmatprep.subr.bf16.mxu0 0
    %906 = vmatpush1.bf16.msra.mxu0 0
    %907 = vmatprep.subr.bf16.mxu0 0
    %908 = vmatpush1.bf16.msra.mxu0 0
    %909 = vmatprep.subr.bf16.mxu0 0
    %910 = vmatpush1.bf16.msra.mxu0 0
    %911 = vmatprep.subr.bf16.mxu0 0
    %912 = vmatpush1.bf16.msra.mxu0 0
    %913 = vmatprep.subr.bf16.mxu0 0
    %914 = vmatpush1.bf16.msra.mxu0 0
    %915 = vmatprep.subr.bf16.mxu0 0
    %916 = vmatpush1.bf16.msra.mxu0 0
    %917 = vmatprep.subr.bf16.mxu0 0
    %918 = vmatpush1.bf16.msra.mxu0 0
    %919 = vmatprep.subr.bf16.mxu0 0
    %920 = vmatpush1.bf16.msra.mxu0 0
    %921 = vmatprep.subr.bf16.mxu0 0
    %922 = vmatpush1.bf16.msra.mxu0 0
    %923 = vmatprep.mubr.bf16.mxu0 0
    %924 = vmatmul.mubr.bf16.gmra.mrb[0].mxu0 %v880
    %v925 = vpop.f32.mrb[0].mxu0
    %v926 = vadd.f32 0.0, %v925
    %v927 = vpop.f32.mrb[0].mxu0
    %v928 = vpop.f32.mrb[0].mxu0
    %v929 = vadd.f32 0.0, %v928
    %v930 = vpop.f32.mrb[0].mxu0
    %931 = vmatprep.mubr.bf16.mxu0 0
    %932 = vmatmul.mubr.bf16.gmra.mrb[0].mxu0 %v883
    %v933 = vpop.f32.mrb[0].mxu0
    %v934 = vadd.f32 0.0, %v933
    %v935 = vpop.f32.mrb[0].mxu0
    %v936 = vpop.f32.mrb[0].mxu0
    %v937 = vadd.f32 0.0, %v936
    %v938 = vpop.f32.mrb[0].mxu0
    %939 = vmatprep.mubr.bf16.mxu0 0
    %940 = vmatmul.mubr.bf16.gmra.mrb[0].mxu0 %v886
    %v941 = vpop.f32.mrb[0].mxu0
    %v942 = vadd.f32 0.0, %v941
    %v943 = vpop.f32.mrb[0].mxu0
    %v944 = vpop.f32.mrb[0].mxu0
    %v945 = vadd.f32 0.0, %v944
    %v946 = vpop.f32.mrb[0].mxu0
    %947 = vmatprep.mubr.bf16.mxu0 0
    %948 = vmatmul.mubr.bf16.gmra.mrb[0].mxu0 %v889
    %v949 = vpop.f32.mrb[0].mxu0
    %v950 = vadd.f32 0.0, %v949
    %v951 = vpop.f32.mrb[0].mxu0
    %v952 = vpop.f32.mrb[0].mxu0
    %v953 = vadd.f32 0.0, %v952
    %v954 = vpop.f32.mrb[0].mxu0
    %955 = vdwg.mxu0
    %v956 = vmax.f32 %v926, 0.0
    %v957 = vmax.f32 %v929, 0.0
    %v958 = vmax.f32 %v934, 0.0
    %v959 = vmax.f32 %v937, 0.0
    %v960 = vmax.f32 %v942, 0.0
    %v961 = vmax.f32 %v945, 0.0
    %v962 = vmax.f32 %v950, 0.0
    %v963 = vmax.f32 %v953, 0.0
    %v964 = vpack.c.bf16 %v957, %v956
    %v965 = vpack.c.bf16 %v959, %v958
    %v966 = vpack.c.bf16 %v961, %v960
    %v967 = vpack.c.bf16 %v963, %v962
    %s968 = scalar_lea.vmem %s2, 64
    %v969 = vld [vmem:[%s968] sm:$0xf]
    %v970 = vld [vmem:[%s968 + $0x4] sm:$0xf]
    %v971 = vld [vmem:[%s968 + $0x8] sm:$0xf]
    %v972 = vld [vmem:[%s968 + $0xc] sm:$0xf]
    %v977 = vunpack.c.l.b16 %v969
    %v978 = vunpack.c.l.b16 %v970
    %v979 = vunpack.c.l.b16 %v971
    %v980 = vunpack.c.l.b16 %v972
    %v981 = vpack.c.b16 %v978, %v977
    %v982 = vpack.c.b16 %v980, %v979
    %v986 = vsel %vm560, %v964, 0
    %v989 = vsel %vm560, %v965, 0
    %v992 = vsel %vm560, %v966, 0
    %v995 = vsel %vm560, %v967, 0
    %997 = vmatprep.subr.bf16.mxu0 0
    %998 = vmatpush1.bf16.msra.mxu0 %v981
    %999 = vmatprep.subr.bf16.mxu0 0
    %1000 = vmatpush1.bf16.msra.mxu0 %v982
    %1001 = vmatprep.subr.bf16.mxu0 0
    %1002 = vmatpush1.bf16.msra.mxu0 0
    %1003 = vmatprep.subr.bf16.mxu0 0
    %1004 = vmatpush1.bf16.msra.mxu0 0
    %1005 = vmatprep.subr.bf16.mxu0 0
    %1006 = vmatpush1.bf16.msra.mxu0 0
    %1007 = vmatprep.subr.bf16.mxu0 0
    %1008 = vmatpush1.bf16.msra.mxu0 0
    %1009 = vmatprep.subr.bf16.mxu0 0
    %1010 = vmatpush1.bf16.msra.mxu0 0
    %1011 = vmatprep.subr.bf16.mxu0 0
    %1012 = vmatpush1.bf16.msra.mxu0 0
    %1013 = vmatprep.subr.bf16.mxu0 0
    %1014 = vmatpush1.bf16.msra.mxu0 0
    %1015 = vmatprep.subr.bf16.mxu0 0
    %1016 = vmatpush1.bf16.msra.mxu0 0
    %1017 = vmatprep.subr.bf16.mxu0 0
    %1018 = vmatpush1.bf16.msra.mxu0 0
    %1019 = vmatprep.subr.bf16.mxu0 0
    %1020 = vmatpush1.bf16.msra.mxu0 0
    %1021 = vmatprep.subr.bf16.mxu0 0
    %1022 = vmatpush1.bf16.msra.mxu0 0
    %1023 = vmatprep.subr.bf16.mxu0 0
    %1024 = vmatpush1.bf16.msra.mxu0 0
    %1025 = vmatprep.subr.bf16.mxu0 0
    %1026 = vmatpush1.bf16.msra.mxu0 0
    %1027 = vmatprep.subr.bf16.mxu0 0
    %1028 = vmatpush1.bf16.msra.mxu0 0
    %1029 = vmatprep.mubr.bf16.mxu0 0
    %1030 = vmatmul.mubr.bf16.gmra.mrb[0].mxu0 %v986
    %v1031 = vpop.f32.mrb[0].mxu0
    %v1032 = vadd.f32 0.0, %v1031
    %v1033 = vpop.f32.mrb[0].mxu0
    %v1034 = vpop.f32.mrb[0].mxu0
    %v1035 = vadd.f32 0.0, %v1034
    %v1036 = vpop.f32.mrb[0].mxu0
    %1037 = vmatprep.mubr.bf16.mxu0 0
    %1038 = vmatmul.mubr.bf16.gmra.mrb[0].mxu0 %v989
    %v1039 = vpop.f32.mrb[0].mxu0
    %v1040 = vadd.f32 0.0, %v1039
    %v1041 = vpop.f32.mrb[0].mxu0
    %v1042 = vpop.f32.mrb[0].mxu0
    %v1043 = vadd.f32 0.0, %v1042
    %v1044 = vpop.f32.mrb[0].mxu0
    %1045 = vmatprep.mubr.bf16.mxu0 0
    %1046 = vmatmul.mubr.bf16.gmra.mrb[0].mxu0 %v992
    %v1047 = vpop.f32.mrb[0].mxu0
    %v1048 = vadd.f32 0.0, %v1047
    %v1049 = vpop.f32.mrb[0].mxu0
    %v1050 = vpop.f32.mrb[0].mxu0
    %v1051 = vadd.f32 0.0, %v1050
    %v1052 = vpop.f32.mrb[0].mxu0
    %1053 = vmatprep.mubr.bf16.mxu0 0
    %1054 = vmatmul.mubr.bf16.gmra.mrb[0].mxu0 %v995
    %v1055 = vpop.f32.mrb[0].mxu0
    %v1056 = vadd.f32 0.0, %v1055
    %v1057 = vpop.f32.mrb[0].mxu0
    %v1058 = vpop.f32.mrb[0].mxu0
    %v1059 = vadd.f32 0.0, %v1058
    %v1060 = vpop.f32.mrb[0].mxu0
    %1061 = vdwg.mxu0
    %1062 = vrot.lane.b32.xlu0 %v1032, 112
    %v1063 = vpop.permute.xlu0 %1062
    %s1064 = vtos %v1063
    %v1065 = vstv %s1064
    %v1066 = vmul.f32 %v1065, %v1032
    %v1067 = vmul.f32 %v1065, %v1035
    %v1068 = vmul.f32 %v1065, %v1040
    %v1069 = vmul.f32 %v1065, %v1043
    %v1070 = vmul.f32 %v1065, %v1048
    %v1071 = vmul.f32 %v1065, %v1051
    %v1072 = vmul.f32 %v1065, %v1056
    %v1073 = vmul.f32 %v1065, %v1059
    %1082 = vrot.lane.b32.xlu0 %v1066, 1
    %v1083 = vpop.permute.xlu0 %1082
    %1084 = vrot.lane.b32.xlu0 %v1067, 1
    %v1085 = vpop.permute.xlu0 %1084
    %1086 = vrot.lane.b32.xlu0 %v1068, 1
    %v1087 = vpop.permute.xlu0 %1086
    %1088 = vrot.lane.b32.xlu0 %v1069, 1
    %v1089 = vpop.permute.xlu0 %1088
    %1090 = vrot.lane.b32.xlu0 %v1070, 1
    %v1091 = vpop.permute.xlu0 %1090
    %1092 = vrot.lane.b32.xlu0 %v1071, 1
    %v1093 = vpop.permute.xlu0 %1092
    %1094 = vrot.lane.b32.xlu0 %v1072, 1
    %v1095 = vpop.permute.xlu0 %1094
    %1096 = vrot.lane.b32.xlu0 %v1073, 1
    %v1097 = vpop.permute.xlu0 %1096
    %v1106 = vsub.f32 %v28, %v1083
    %v1107 = vsub.f32 %v29, %v1085
    %v1108 = vsub.f32 %v30, %v1087
    %v1109 = vsub.f32 %v31, %v1089
    %v1110 = vsub.f32 %v32, %v1091
    %v1111 = vsub.f32 %v33, %v1093
    %v1112 = vsub.f32 %v34, %v1095
    %v1113 = vsub.f32 %v35, %v1097
    %1122 = vrot.lane.b32.xlu0 %v1106, 127
    %v1123 = vpop.permute.xlu0 %1122
    %1124 = vrot.lane.b32.xlu0 %v1107, 127
    %v1125 = vpop.permute.xlu0 %1124
    %1126 = vrot.lane.b32.xlu0 %v1108, 127
    %v1127 = vpop.permute.xlu0 %1126
    %1128 = vrot.lane.b32.xlu0 %v1109, 127
    %v1129 = vpop.permute.xlu0 %1128
    %1130 = vrot.lane.b32.xlu0 %v1110, 127
    %v1131 = vpop.permute.xlu0 %1130
    %1132 = vrot.lane.b32.xlu0 %v1111, 127
    %v1133 = vpop.permute.xlu0 %1132
    %1134 = vrot.lane.b32.xlu0 %v1112, 127
    %v1135 = vpop.permute.xlu0 %1134
    %1136 = vrot.lane.b32.xlu0 %v1113, 127
    %v1137 = vpop.permute.xlu0 %1136
    %vm1146 = vcmask 7168
    %1147 = vst.msk [vmem:[%s3] sm:$0xff] %vm1146, %v1123
    %1148 = vst.msk [vmem:[%s3 + $0x8] sm:$0xff] %vm1146, %v1125
    %1149 = vst.msk [vmem:[%s3 + $0x10] sm:$0xff] %vm1146, %v1127
    %1150 = vst.msk [vmem:[%s3 + $0x18] sm:$0xff] %vm1146, %v1129
    %1151 = vst.msk [vmem:[%s3 + $0x20] sm:$0xff] %vm1146, %v1131
    %1152 = vst.msk [vmem:[%s3 + $0x28] sm:$0xff] %vm1146, %v1133
    %1153 = vst.msk [vmem:[%s3 + $0x30] sm:$0xff] %vm1146, %v1135
    %1154 = vst.msk [vmem:[%s3 + $0x38] sm:$0xff] %vm1146, %v1137
    // Predicated region
    $region18: #{quadratics_forward.1} parent=1 // pred_check
      _
    $region19: #{quadratics_forward.1} parent=1 // pred_check_branch
      %1156 = sbr.rel (0) target = $region21
    $region20: #{quadratics_forward.1} parent=1 // pred_region
      _
    $region21: #{quadratics_forward.1} parent=1 // pred_fallthru
      _
    // Predicated region
    $region22: #{quadratics_forward.1} parent=1 // pred_check
      _
    $region23: #{quadratics_forward.1} parent=1 // pred_check_branch
      %1158 = sbr.rel (0) target = $region25
    $region24: #{quadratics_forward.1} parent=1 // pred_region
      _
    $region25: #{quadratics_forward.1} parent=1 // pred_fallthru
      _
    %1159 = vsyncpa [#allocation3], 1

</llo_original>
